<compile_context>
chip_gen: v5e
topology: v5e:2x2
jax: 0.10.0
libtpu: 0.0.40
codegen_flags: <defaults>
</compile_context>

<pallas_src>
import functools

import jax
import jax.numpy as jnp
from jax.experimental import pallas as pl
from jax.experimental.pallas import tpu as pltpu

LANE = 128
HIDDEN = 128          # fc1/fc2 width fixed by the PyTorch module
NEG_INF_BIAS = -1e30  # padded fc3 bias columns -> exp() == 0 in the softmax


def _round_up(x, m):
    return ((x + m - 1) // m) * m


def policy_kernel(x_ref, w1_ref, b1_ref, w2_ref, b2_ref, w3_ref, b3_ref, o_ref):
    # fc1 + relu -- x arrives f32 from HBM; cast to bf16 in-register (VPU pack,
    # hidden under MXU/DMA slack). All matmuls accumulate in f32 on the MXU;
    # bias add / ReLU / softmax math stays f32.
    x = x_ref[...].astype(jnp.bfloat16)
    h1 = jnp.dot(x, w1_ref[...], preferred_element_type=jnp.float32) + b1_ref[...]
    h1 = jnp.maximum(h1, 0.0)
    # fc2 + relu
    h2 = jnp.dot(h1.astype(jnp.bfloat16), w2_ref[...],
                 preferred_element_type=jnp.float32) + b2_ref[...]
    h2 = jnp.maximum(h2, 0.0)
    # fc3 (lane-padded to 128 cols) + softmax; padded columns have zero weights
    # and bias -1e30, so they contribute exp() == 0.
    logits = jnp.dot(h2.astype(jnp.bfloat16), w3_ref[...],
                     preferred_element_type=jnp.float32) + b3_ref[...]
    m = jnp.max(logits, axis=-1, keepdims=True)
    e = jnp.exp(logits - m)
    denom = jnp.sum(e, axis=-1, keepdims=True)
    # Exact divide (not approx reciprocal): row sums hit 1.0 to f32 precision
    # before the bf16 store; the divide is negligible at these sizes.
    o_ref[...] = (e / denom).astype(o_ref.dtype)


def prepare_params(params):
    """One-time parameter prep. Call once, reuse the result across forward calls.

    Pads fc3 to a lane-dense 128-column output, casts matmul operands to bf16 and
    biases to f32. Keeping this out of the jitted forward removes a handful of
    tiny XLA ops + HBM round trips from every policy evaluation.
    """
    w1, b1 = params["w1"], params["b1"]
    w2, b2 = params["w2"], params["b2"]
    w3, b3 = params["w3"], params["b3"]
    H = w1.shape[1]
    A = w3.shape[1]
    A_pad = _round_up(max(A, LANE), LANE)

    w3p = jnp.zeros((H, A_pad), jnp.float32).at[:, :A].set(w3.astype(jnp.float32))
    b3p = jnp.full((1, A_pad), NEG_INF_BIAS, dtype=jnp.float32).at[:, :A].set(
        b3.reshape(1, A).astype(jnp.float32))

    return {
        "w1": w1.astype(jnp.bfloat16),
        "b1": b1.reshape(1, H).astype(jnp.float32),
        "w2": w2.astype(jnp.bfloat16),
        "b2": b2.reshape(1, H).astype(jnp.float32),
        "w3": w3p.astype(jnp.bfloat16),
        "b3": b3p,
        "action_size": A,  # python int, not passed into the jitted kernel call
    }


@functools.partial(jax.jit, static_argnames=("tile_b",))
def _policy_padded(state, w1, b1, w2, b2, w3, b3, *, tile_b=None):
    """Returns the lane-dense padded probability slab: (B_pad, 128) bf16."""
    B, S = state.shape
    H = w1.shape[1]
    A_pad = w3.shape[1]

    # Batch tiling: multiple of 8 (sublane rule). Default = two even tiles when
    # possible (v7x can shard them across its 2 TensorCores), else one tile
    # (fewest ~0.35us grid steps on single-TC v5e/v6e).
    B8 = _round_up(max(B, 8), 8)
    if tile_b is None:
        tile_b = B8 // 2 if (B8 >= 16 and B8 % 16 == 0) else B8
    tile_b = max(8, _round_up(min(tile_b, B8), 8))
    B_pad = _round_up(B8, tile_b)

    x = state.astype(jnp.float32)
    if B_pad != B:
        x = jnp.pad(x, ((0, B_pad - B), (0, 0)))

    flops = 2 * B_pad * (S * H + H * H + H * A_pad)
    bytes_accessed = (
        B_pad * S * 4                        # x (f32 in)
        + (S * H + H * H + H * A_pad) * 2    # bf16 weights (VMEM-resident, read once)
        + (2 * H + A_pad) * 4                # f32 biases
        + B_pad * A_pad * 2                  # bf16 output slab
    )
    cost = pl.CostEstimate(flops=flops, transcendentals=B_pad * A_pad,
                           bytes_accessed=bytes_accessed)

    return pl.pallas_call(
        policy_kernel,
        out_shape=jax.ShapeDtypeStruct((B_pad, A_pad), jnp.bfloat16),
        grid_spec=pltpu.PrefetchScalarGridSpec(
            num_scalar_prefetch=0,
            grid=(B_pad // tile_b,),
            in_specs=[
                pl.BlockSpec((tile_b, S), lambda i: (i, 0)),   # x: tiled over batch
                # Weights/biases: constant index_map -> fetched once, VMEM-resident
                # across batch tiles (~70 KB total; pl.Buffered(1) would drop the
                # redundant second buffer but is unnecessary at this footprint).
                pl.BlockSpec((S, H), lambda i: (0, 0)),        # w1
                pl.BlockSpec((1, H), lambda i: (0, 0)),        # b1
                pl.BlockSpec((H, H), lambda i: (0, 0)),        # w2
                pl.BlockSpec((1, H), lambda i: (0, 0)),        # b2
                pl.BlockSpec((H, A_pad), lambda i: (0, 0)),    # w3 (lane-padded)
                pl.BlockSpec((1, A_pad), lambda i: (0, 0)),    # b3 (lane-padded)
            ],
            out_specs=pl.BlockSpec((tile_b, A_pad), lambda i: (i, 0)),
        ),
        compiler_params=pltpu.CompilerParams(
            dimension_semantics=("parallel",),
        ),
        cost_estimate=cost,
    )(x, w1, b1, w2, b2, w3, b3)


def policy_network_padded(state, prepped, *, tile_b=None):
    """Lane-dense padded output (B_pad, 128) bf16 -- preferred for fused consumers."""
    return _policy_padded(state, prepped["w1"], prepped["b1"], prepped["w2"],
                          prepped["b2"], prepped["w3"], prepped["b3"], tile_b=tile_b)


def policy_network_forward(state, prepped, *, tile_b=None):
    """Module-equivalent forward: (B, state_size) f32 -> (B, action_size) f32 probs."""
    B = state.shape[0]
    A = prepped["action_size"]
    slab = policy_network_padded(state, prepped, tile_b=tile_b)
    # Tiny (B, A) slice/cast; consumers that can work directly on the padded slab
    # should call policy_network_padded() and skip this extra HBM pass.
    return slab[:B, :A].astype(jnp.float32)


def init_params(key, state_size, hidden, action_size):
    """Deterministic (seeded) init; shapes mirror the PyTorch module (stored transposed)."""
    k1, k2, k3, k4, k5, k6 = jax.random.split(key, 6)
    s1 = 1.0 / jnp.sqrt(state_size)
    s2 = 1.0 / jnp.sqrt(hidden)
    return {
        "w1": jax.random.uniform(k1, (state_size, hidden), jnp.float32, -s1, s1),
        "b1": jax.random.uniform(k2, (1, hidden), jnp.float32, -s1, s1),
        "w2": jax.random.uniform(k3, (hidden, hidden), jnp.float32, -s2, s2),
        "b2": jax.random.uniform(k4, (1, hidden), jnp.float32, -s2, s2),
        "w3": jax.random.uniform(k5, (hidden, action_size), jnp.float32, -s2, s2),
        "b3": jax.random.uniform(k6, (1, action_size), jnp.float32, -s2, s2),
    }


def reference_forward(state, params):
    h1 = jnp.maximum(state @ params["w1"] + params["b1"], 0.0)
    h2 = jnp.maximum(h1 @ params["w2"] + params["b2"], 0.0)
    logits = h2 @ params["w3"] + params["b3"]
    return jax.nn.softmax(logits, axis=-1)


if __name__ == "__main__":
    key = jax.random.PRNGKey(0)
    k_state, k_params = jax.random.split(key)

    batch = 64
    state_size = 16
    action_size = 8

    state = jax.random.normal(k_state, (batch, state_size), dtype=jnp.float32)
    params = init_params(k_params, state_size, HIDDEN, action_size)

    prepped = prepare_params(params)   # one-time: lane padding + dtype casts

    probs = policy_network_forward(state, prepped)
    probs = jax.block_until_ready(probs)

    ref = reference_forward(state, params)
    assert probs.shape == (batch, action_size)
    assert probs.dtype == jnp.float32
    # bf16 matmul operands + bf16 output slab -> relaxed tolerance vs f32 reference.
    assert jnp.allclose(probs, ref, atol=2e-2, rtol=2e-2)
    # softmax normalized exactly in f32; only bf16 output rounding remains.
    assert jnp.allclose(jnp.sum(probs, axis=-1), 1.0, atol=1e-2)

    print("KERNEL_OK")
</pallas_src>

<mosaic_0001>
module attributes {stable_mosaic.version = 11 : i64} {
  func.func @policy_kernel(%arg0: i32, %arg1: memref<32x16xf32, #tpu.memory_space<vmem>>, %arg2: memref<16x128xbf16, #tpu.memory_space<vmem>>, %arg3: memref<1x128xf32, #tpu.memory_space<vmem>>, %arg4: memref<128x128xbf16, #tpu.memory_space<vmem>>, %arg5: memref<1x128xf32, #tpu.memory_space<vmem>>, %arg6: memref<128x128xbf16, #tpu.memory_space<vmem>>, %arg7: memref<1x128xf32, #tpu.memory_space<vmem>>, %arg8: memref<32x128xbf16, #tpu.memory_space<vmem>>) attributes {dimension_semantics = [#tpu.dimension_semantics<parallel>], iteration_bounds = array<i64: 2>, scalar_prefetch = 0 : i64, scratch_operands = 0 : i64, tpu.core_type = #tpu.core_type<tc>, window_params = [{transform_indices = @transform_0, window_bounds = array<i64: 32, 16>}, {pipeline_mode = #tpu.pipeline_mode<synchronous>, transform_indices = @transform_1, window_bounds = array<i64: 16, 128>}, {pipeline_mode = #tpu.pipeline_mode<synchronous>, transform_indices = @transform_2, window_bounds = array<i64: 1, 128>}, {pipeline_mode = #tpu.pipeline_mode<synchronous>, transform_indices = @transform_3, window_bounds = array<i64: 128, 128>}, {pipeline_mode = #tpu.pipeline_mode<synchronous>, transform_indices = @transform_4, window_bounds = array<i64: 1, 128>}, {pipeline_mode = #tpu.pipeline_mode<synchronous>, transform_indices = @transform_5, window_bounds = array<i64: 128, 128>}, {pipeline_mode = #tpu.pipeline_mode<synchronous>, transform_indices = @transform_6, window_bounds = array<i64: 1, 128>}, {transform_indices = @transform_7, window_bounds = array<i64: 32, 128>}]} {
    %c0 = arith.constant 0 : index
    %c0_0 = arith.constant 0 : index
    %0 = vector.load %arg1[%c0, %c0_0] : memref<32x16xf32, #tpu.memory_space<vmem>>, vector<32x16xf32>
    %1 = arith.truncf %0 : vector<32x16xf32> to vector<32x16xbf16>
    %c0_1 = arith.constant 0 : index
    %c0_2 = arith.constant 0 : index
    %2 = vector.load %arg2[%c0_1, %c0_2] : memref<16x128xbf16, #tpu.memory_space<vmem>>, vector<16x128xbf16>
    %cst = arith.constant dense<0.000000e+00> : vector<32x128xf32>
    %3 = tpu.matmul %1, %2, %cst {dimension_numbers = #tpu.dot_dimension_numbers<[1], [0], [0], [1], [0, 0, 1, 1], [], []>} : vector<32x16xbf16>, vector<16x128xbf16>, vector<32x128xf32> -> vector<32x128xf32>
    %c0_3 = arith.constant 0 : index
    %c0_4 = arith.constant 0 : index
    %4 = vector.load %arg3[%c0_3, %c0_4] : memref<1x128xf32, #tpu.memory_space<vmem>>, vector<1x128xf32>
    %5 = vector.broadcast %4 : vector<1x128xf32> to vector<32x128xf32>
    %6 = arith.addf %3, %5 : vector<32x128xf32>
    %cst_5 = arith.constant 0.000000e+00 : f32
    %7 = vector.broadcast %cst_5 : f32 to vector<32x128xf32>
    %8 = arith.maximumf %6, %7 : vector<32x128xf32>
    %9 = arith.truncf %8 : vector<32x128xf32> to vector<32x128xbf16>
    %c0_6 = arith.constant 0 : index
    %c0_7 = arith.constant 0 : index
    %10 = vector.load %arg4[%c0_6, %c0_7] : memref<128x128xbf16, #tpu.memory_space<vmem>>, vector<128x128xbf16>
    %cst_8 = arith.constant dense<0.000000e+00> : vector<32x128xf32>
    %11 = tpu.matmul %9, %10, %cst_8 {dimension_numbers = #tpu.dot_dimension_numbers<[1], [0], [0], [1], [0, 0, 1, 1], [], []>} : vector<32x128xbf16>, vector<128x128xbf16>, vector<32x128xf32> -> vector<32x128xf32>
    %c0_9 = arith.constant 0 : index
    %c0_10 = arith.constant 0 : index
    %12 = vector.load %arg5[%c0_9, %c0_10] : memref<1x128xf32, #tpu.memory_space<vmem>>, vector<1x128xf32>
    %13 = vector.broadcast %12 : vector<1x128xf32> to vector<32x128xf32>
    %14 = arith.addf %11, %13 : vector<32x128xf32>
    %cst_11 = arith.constant 0.000000e+00 : f32
    %15 = vector.broadcast %cst_11 : f32 to vector<32x128xf32>
    %16 = arith.maximumf %14, %15 : vector<32x128xf32>
    %17 = arith.truncf %16 : vector<32x128xf32> to vector<32x128xbf16>
    %c0_12 = arith.constant 0 : index
    %c0_13 = arith.constant 0 : index
    %18 = vector.load %arg6[%c0_12, %c0_13] : memref<128x128xbf16, #tpu.memory_space<vmem>>, vector<128x128xbf16>
    %cst_14 = arith.constant dense<0.000000e+00> : vector<32x128xf32>
    %19 = tpu.matmul %17, %18, %cst_14 {dimension_numbers = #tpu.dot_dimension_numbers<[1], [0], [0], [1], [0, 0, 1, 1], [], []>} : vector<32x128xbf16>, vector<128x128xbf16>, vector<32x128xf32> -> vector<32x128xf32>
    %c0_15 = arith.constant 0 : index
    %c0_16 = arith.constant 0 : index
    %20 = vector.load %arg7[%c0_15, %c0_16] : memref<1x128xf32, #tpu.memory_space<vmem>>, vector<1x128xf32>
    %21 = vector.broadcast %20 : vector<1x128xf32> to vector<32x128xf32>
    %22 = arith.addf %19, %21 : vector<32x128xf32>
    %cst_17 = arith.constant dense<0xFF800000> : vector<32xf32>
    %23 = vector.multi_reduction <maximumf>, %22, %cst_17 [1] : vector<32x128xf32> to vector<32xf32>
    %24 = vector.shape_cast %23 : vector<32xf32> to vector<32x1xf32>
    %25 = vector.broadcast %24 : vector<32x1xf32> to vector<32x128xf32>
    %26 = arith.subf %22, %25 : vector<32x128xf32>
    %27 = math.exp %26 : vector<32x128xf32>
    %cst_18 = arith.constant dense<0.000000e+00> : vector<32xf32>
    %28 = vector.multi_reduction <add>, %27, %cst_18 [1] : vector<32x128xf32> to vector<32xf32>
    %29 = vector.shape_cast %28 : vector<32xf32> to vector<32x1xf32>
    %30 = vector.broadcast %29 : vector<32x1xf32> to vector<32x128xf32>
    %31 = arith.divf %27, %30 : vector<32x128xf32>
    %32 = arith.truncf %31 : vector<32x128xf32> to vector<32x128xbf16>
    %c0_19 = arith.constant 0 : index
    %c0_20 = arith.constant 0 : index
    %33 = vector.load %arg8[%c0_19, %c0_20] : memref<32x128xbf16, #tpu.memory_space<vmem>>, vector<32x128xbf16>
    tpu.vector_store %arg8[%c0_19, %c0_20], %32 {strides = array<i32>} : memref<32x128xbf16, #tpu.memory_space<vmem>>, vector<32x128xbf16>,
    return
  }
  func.func @transform_0(%arg0: i32) -> (i32, i32) {
    %c0_i32 = arith.constant 0 : i32
    %c0_i32_0 = arith.constant 0 : i32
    return %arg0, %c0_i32 : i32, i32
  }
  func.func @transform_1(%arg0: i32) -> (i32, i32) {
    %c0_i32 = arith.constant 0 : i32
    %c0_i32_0 = arith.constant 0 : i32
    %c0_i32_1 = arith.constant 0 : i32
    return %c0_i32, %c0_i32_0 : i32, i32
  }
  func.func @transform_2(%arg0: i32) -> (i32, i32) {
    %c0_i32 = arith.constant 0 : i32
    %c0_i32_0 = arith.constant 0 : i32
    %c0_i32_1 = arith.constant 0 : i32
    return %c0_i32, %c0_i32_0 : i32, i32
  }
  func.func @transform_3(%arg0: i32) -> (i32, i32) {
    %c0_i32 = arith.constant 0 : i32
    %c0_i32_0 = arith.constant 0 : i32
    %c0_i32_1 = arith.constant 0 : i32
    return %c0_i32, %c0_i32_0 : i32, i32
  }
  func.func @transform_4(%arg0: i32) -> (i32, i32) {
    %c0_i32 = arith.constant 0 : i32
    %c0_i32_0 = arith.constant 0 : i32
    %c0_i32_1 = arith.constant 0 : i32
    return %c0_i32, %c0_i32_0 : i32, i32
  }
  func.func @transform_5(%arg0: i32) -> (i32, i32) {
    %c0_i32 = arith.constant 0 : i32
    %c0_i32_0 = arith.constant 0 : i32
    %c0_i32_1 = arith.constant 0 : i32
    return %c0_i32, %c0_i32_0 : i32, i32
  }
  func.func @transform_6(%arg0: i32) -> (i32, i32) {
    %c0_i32 = arith.constant 0 : i32
    %c0_i32_0 = arith.constant 0 : i32
    %c0_i32_1 = arith.constant 0 : i32
    return %c0_i32, %c0_i32_0 : i32, i32
  }
  func.func @transform_7(%arg0: i32) -> (i32, i32) {
    %c0_i32 = arith.constant 0 : i32
    %c0_i32_0 = arith.constant 0 : i32
    return %arg0, %c0_i32 : i32, i32
  }
}

</mosaic_0001>

<llo_original>
// kernel: _policy_padded.1
$region0: #{_policy_padded.1}
  #allocation0 [shape = 'u32[]', space=smem, size = 0x4, offset = 0x4, fixed_abs, tag = 'smem constant byte address 0x4 - core index']
  #allocation1 [shape = 'u32[72,128]{1,0:T(1,128)}', space=vmem, size = 0x9000, scoped, tag = 'internal scratch']
  %s0 = inlined_call_operand.vmem [shape: f32[64,16], index: 0, kind: input, shape index: {}]
  %s1 = inlined_call_operand.vmem [shape: bf16[16,128], index: 1, kind: input, shape index: {}]
  %s2 = inlined_call_operand.vmem [shape: f32[1,128], index: 2, kind: input, shape index: {}]
  %s3 = inlined_call_operand.vmem [shape: bf16[128,128], index: 3, kind: input, shape index: {}]
  %s4 = inlined_call_operand.vmem [shape: f32[1,128], index: 4, kind: input, shape index: {}]
  %s5 = inlined_call_operand.hbm [shape: bf16[128,128], index: 5, kind: input, shape index: {}]
  %s6 = inlined_call_operand.vmem [shape: f32[1,128], index: 6, kind: input, shape index: {}]
  %s7 = inlined_call_operand.hbm [shape: bf16[64,128], index: 7, kind: output, shape index: {}]
  %s8 = sld [smem:[#allocation0]]
  $region65: #{_policy_padded.1} parent=0
    _
  %s10 = ssub.s32 1, %s8
  %s11 = scalar_select 0, %s10, %s8
  $region1: #{_policy_padded.1} parent=0
    #allocation2 [shape = 'u8[32768]{0}', space=vmem, size = 0x8000, scoped, tag = 'input window, operand 5, single buffered']
    #allocation3 [shape = 's32[2]{0}', space=sflag, size = 0x8, scoped, tag = 'scoped memory for _policy_padded.1']
    #allocation4 [shape = 's32[2]{0}', space=sflag, size = 0x8, scoped, tag = 'scoped memory for _policy_padded.1']
    #allocation5 [shape = 'u8[16384]{0}', space=vmem, size = 0x4000, scoped, tag = 'output window, operand 0']
    %12 = vsyncpa [#allocation3], 0
    %13 = vsyncpa [#allocation4], 0
    %s14 = scalar_lea.sflag [#allocation4], 1
    %15 = vsyncpa %s14, 0
    loop: start=0, step=1, limit=4
    $region2: #{_policy_padded.1} parent=1 // loop_pre_header
      _
    $region3: #{_policy_padded.1} parent=1 // loop_header
      %s17 = sphi 0, %s21
      %p18 = scmp.ge.s32.totalorder %s17, 4
      %s27 = sphi 0, %s29
      %s30 = sphi 0, %s27
      %s31 = sphi 0, %s30
      %s47 = sphi 0, %s31
      %s51 = sphi 0, %s51
      %s53 = sphi 0, %s51
      %s54 = sphi 0, %s53
      %s68 = sphi 0, %s54
      %s72 = sphi 0, %s72
      %s74 = sphi 0, %s72
      %s75 = sphi 0, %s74
      %s89 = sphi 0, %s75
      %s93 = sphi 0, %s93
      %s95 = sphi 0, %s93
      %s96 = sphi 0, %s95
      %s110 = sphi 0, %s96
      %s114 = sphi 0, %s114
      %s116 = sphi 0, %s114
      %s117 = sphi 0, %s116
      %s131 = sphi 0, %s117
      %s135 = sphi 0, %s135
      %s137 = sphi 0, %s135
      %s138 = sphi 0, %s137
      %s152 = sphi 0, %s138
      %s156 = sphi 0, %s156
      %s158 = sphi 0, %s156
      %s159 = sphi 0, %s158
      %s173 = sphi 0, %s159
      %s179 = sphi 0, %s181
      %s182 = sphi 0, %s179
      %s183 = sphi 0, %s182
      %s199 = sphi 0, %s183
    $region4: #{_policy_padded.1} parent=1 // loop_header_branch
      %20 = sbr.rel (%p18) target = $region8
    $region5: #{_policy_padded.1} parent=1 // loop_body
      %s22 = ssub.s32 %s17, 1
      %s23 = ssub.s32 %s17, 2
      %s24 = sadd.s32 %s17, 1
      %s25 = ssub.s32 %s17, %s24
      %p26 = scmp.eq.s32.totalorder %s25, 0
      %s28 = sadd.s32 %s27, 1
      %s29 = scalar_select %p26, %s27, %s28
      %p32 = pneg %p26
      %p33 = scmp.eq.s32.totalorder %s17, 1
      %p34 = por %p32, %p33
      %p35 = scmp.ne.s32.totalorder %s27, %s30
      %p36 = scmp.eq.s32.totalorder %s17, 0
      %p37 = por %p35, %p36
      %p38 = scmp.ne.s32.totalorder %s27, %s30
      %p39 = scmp.eq.s32.totalorder %s22, 1
      %p40 = por %p38, %p39
      %p41 = scmp.ne.s32.totalorder %s30, %s31
      %p42 = scmp.eq.s32.totalorder %s22, 0
      %p43 = por %p41, %p42
      %p44 = scmp.ne.s32.totalorder %s30, %s31
      %p45 = scmp.eq.s32.totalorder %s23, 1
      %p46 = por %p44, %p45
      %p48 = scmp.ne.s32.totalorder %s31, %s47
      %p49 = scmp.eq.s32.totalorder %s23, 0
      %p50 = por %p48, %p49
      %s52 = sadd.s32 %s51, 1
      %p55 = scmp.eq.s32.totalorder %s17, 1
      %p56 = scmp.ne.s32.totalorder %s51, %s53
      %p57 = scmp.eq.s32.totalorder %s17, 0
      %p58 = por %p56, %p57
      %p59 = scmp.ne.s32.totalorder %s51, %s53
      %p60 = scmp.eq.s32.totalorder %s22, 1
      %p61 = por %p59, %p60
      %p62 = scmp.ne.s32.totalorder %s53, %s54
      %p63 = scmp.eq.s32.totalorder %s22, 0
      %p64 = por %p62, %p63
      %p65 = scmp.ne.s32.totalorder %s53, %s54
      %p66 = scmp.eq.s32.totalorder %s23, 1
      %p67 = por %p65, %p66
      %p69 = scmp.ne.s32.totalorder %s54, %s68
      %p70 = scmp.eq.s32.totalorder %s23, 0
      %p71 = por %p69, %p70
      %s73 = sadd.s32 %s72, 1
      %p76 = scmp.eq.s32.totalorder %s17, 1
      %p77 = scmp.ne.s32.totalorder %s72, %s74
      %p78 = scmp.eq.s32.totalorder %s17, 0
      %p79 = por %p77, %p78
      %p80 = scmp.ne.s32.totalorder %s72, %s74
      %p81 = scmp.eq.s32.totalorder %s22, 1
      %p82 = por %p80, %p81
      %p83 = scmp.ne.s32.totalorder %s74, %s75
      %p84 = scmp.eq.s32.totalorder %s22, 0
      %p85 = por %p83, %p84
      %p86 = scmp.ne.s32.totalorder %s74, %s75
      %p87 = scmp.eq.s32.totalorder %s23, 1
      %p88 = por %p86, %p87
      %p90 = scmp.ne.s32.totalorder %s75, %s89
      %p91 = scmp.eq.s32.totalorder %s23, 0
      %p92 = por %p90, %p91
      %s94 = sadd.s32 %s93, 1
      %p97 = scmp.eq.s32.totalorder %s17, 1
      %p98 = scmp.ne.s32.totalorder %s93, %s95
      %p99 = scmp.eq.s32.totalorder %s17, 0
      %p100 = por %p98, %p99
      %p101 = scmp.ne.s32.totalorder %s93, %s95
      %p102 = scmp.eq.s32.totalorder %s22, 1
      %p103 = por %p101, %p102
      %p104 = scmp.ne.s32.totalorder %s95, %s96
      %p105 = scmp.eq.s32.totalorder %s22, 0
      %p106 = por %p104, %p105
      %p107 = scmp.ne.s32.totalorder %s95, %s96
      %p108 = scmp.eq.s32.totalorder %s23, 1
      %p109 = por %p107, %p108
      %p111 = scmp.ne.s32.totalorder %s96, %s110
      %p112 = scmp.eq.s32.totalorder %s23, 0
      %p113 = por %p111, %p112
      %s115 = sadd.s32 %s114, 1
      %p118 = scmp.eq.s32.totalorder %s17, 1
      %p119 = scmp.ne.s32.totalorder %s114, %s116
      %p120 = scmp.eq.s32.totalorder %s17, 0
      %p121 = por %p119, %p120
      %p122 = scmp.ne.s32.totalorder %s114, %s116
      %p123 = scmp.eq.s32.totalorder %s22, 1
      %p124 = por %p122, %p123
      %p125 = scmp.ne.s32.totalorder %s116, %s117
      %p126 = scmp.eq.s32.totalorder %s22, 0
      %p127 = por %p125, %p126
      %p128 = scmp.ne.s32.totalorder %s116, %s117
      %p129 = scmp.eq.s32.totalorder %s23, 1
      %p130 = por %p128, %p129
      %p132 = scmp.ne.s32.totalorder %s117, %s131
      %p133 = scmp.eq.s32.totalorder %s23, 0
      %p134 = por %p132, %p133
      %s136 = sadd.s32 %s135, 1
      %p139 = scmp.eq.s32.totalorder %s17, 1
      %p140 = scmp.ne.s32.totalorder %s135, %s137
      %p141 = scmp.eq.s32.totalorder %s17, 0
      %p142 = por %p140, %p141
      %p143 = scmp.ne.s32.totalorder %s135, %s137
      %p144 = scmp.eq.s32.totalorder %s22, 1
      %p145 = por %p143, %p144
      %p146 = scmp.ne.s32.totalorder %s137, %s138
      %p147 = scmp.eq.s32.totalorder %s22, 0
      %p148 = por %p146, %p147
      %p149 = scmp.ne.s32.totalorder %s137, %s138
      %p150 = scmp.eq.s32.totalorder %s23, 1
      %p151 = por %p149, %p150
      %p153 = scmp.ne.s32.totalorder %s138, %s152
      %p154 = scmp.eq.s32.totalorder %s23, 0
      %p155 = por %p153, %p154
      %s157 = sadd.s32 %s156, 1
      %p160 = scmp.eq.s32.totalorder %s17, 1
      %p161 = scmp.ne.s32.totalorder %s156, %s158
      %p162 = scmp.eq.s32.totalorder %s17, 0
      %p163 = por %p161, %p162
      %p164 = scmp.ne.s32.totalorder %s156, %s158
      %p165 = scmp.eq.s32.totalorder %s22, 1
      %p166 = por %p164, %p165
      %p167 = scmp.ne.s32.totalorder %s158, %s159
      %p168 = scmp.eq.s32.totalorder %s22, 0
      %p169 = por %p167, %p168
      %p170 = scmp.ne.s32.totalorder %s158, %s159
      %p171 = scmp.eq.s32.totalorder %s23, 1
      %p172 = por %p170, %p171
      %p174 = scmp.ne.s32.totalorder %s159, %s173
      %p175 = scmp.eq.s32.totalorder %s23, 0
      %p176 = por %p174, %p175
      %s177 = ssub.s32 %s17, %s24
      %p178 = scmp.eq.s32.totalorder %s177, 0
      %s180 = sadd.s32 %s179, 1
      %s181 = scalar_select %p178, %s179, %s180
      %p184 = pneg %p178
      %p185 = scmp.eq.s32.totalorder %s17, 1
      %p186 = por %p184, %p185
      %p187 = scmp.ne.s32.totalorder %s179, %s182
      %p188 = scmp.eq.s32.totalorder %s17, 0
      %p189 = por %p187, %p188
      %p190 = scmp.ne.s32.totalorder %s179, %s182
      %p191 = scmp.eq.s32.totalorder %s22, 1
      %p192 = por %p190, %p191
      %p193 = scmp.ne.s32.totalorder %s182, %s183
      %p194 = scmp.eq.s32.totalorder %s22, 0
      %p195 = por %p193, %p194
      %p196 = scmp.ne.s32.totalorder %s182, %s183
      %p197 = scmp.eq.s32.totalorder %s23, 1
      %p198 = por %p196, %p197
      %p200 = scmp.ne.s32.totalorder %s183, %s199
      %p201 = scmp.eq.s32.totalorder %s23, 0
      %p202 = por %p200, %p201
      %p203 = scmp.le.s32.totalorder 1, %s17
      %p204 = scmp.lt.s32.totalorder %s17, 3
      %p205 = pnand %p203, %p204
      %p206 = pneg %p205
      // Predicated region
      $region9: #{_policy_padded.1} parent=5 // pred_check
        _
      $region10: #{_policy_padded.1} parent=5 // pred_check_branch
        %208 = sbr.rel (%p205) target = $region12
      $region11: #{_policy_padded.1} parent=5 // pred_region
        %s209 = ssub.s32 %s17, 1
        // Predicated region
        $region13: #{_policy_padded.1} parent=11 // pred_check
          %p210 = pneg %p64
        $region14: #{_policy_padded.1} parent=11 // pred_check_branch
          %212 = sbr.rel (%p210) target = $region16
        $region15: #{_policy_padded.1} parent=11 // pred_region
          _
        $region16: #{_policy_padded.1} parent=11 // pred_fallthru
          _
        // Predicated region
        $region17: #{_policy_padded.1} parent=11 // pred_check
          %p213 = pneg %p85
        $region18: #{_policy_padded.1} parent=11 // pred_check_branch
          %215 = sbr.rel (%p213) target = $region20
        $region19: #{_policy_padded.1} parent=11 // pred_region
          _
        $region20: #{_policy_padded.1} parent=11 // pred_fallthru
          _
        // Predicated region
        $region21: #{_policy_padded.1} parent=11 // pred_check
          %p216 = pneg %p106
        $region22: #{_policy_padded.1} parent=11 // pred_check_branch
          %218 = sbr.rel (%p216) target = $region24
        $region23: #{_policy_padded.1} parent=11 // pred_region
          _
        $region24: #{_policy_padded.1} parent=11 // pred_fallthru
          _
        // Predicated region
        $region25: #{_policy_padded.1} parent=11 // pred_check
          %p219 = pneg %p127
        $region26: #{_policy_padded.1} parent=11 // pred_check_branch
          %221 = sbr.rel (%p219) target = $region28
        $region27: #{_policy_padded.1} parent=11 // pred_region
          _
        $region28: #{_policy_padded.1} parent=11 // pred_fallthru
          _
        // Predicated region
        $region29: #{_policy_padded.1} parent=11 // pred_check
          %p222 = pneg %p148
        $region30: #{_policy_padded.1} parent=11 // pred_check_branch
          %224 = sbr.rel (%p222) target = $region32
        $region31: #{_policy_padded.1} parent=11 // pred_region
          %226 = vsyncadd [#allocation3], 0
          %s227 = sshll.u32 %s5, 4
          %s228 = int_to_ptr.hbm [resolvable:$true] %s227
          %s229 = sshll.u32 [#allocation2], 4
          %s230 = int_to_ptr.vmem [resolvable:$true] %s229
          %235 = dma.hbm_to_vmem [thread:$0]  %s228, 1024, %s230, [#allocation3], 64, 64, 4
        $region32: #{_policy_padded.1} parent=11 // pred_fallthru
          _
        // Predicated region
        $region33: #{_policy_padded.1} parent=11 // pred_check
          %p236 = pneg %p169
        $region34: #{_policy_padded.1} parent=11 // pred_check_branch
          %238 = sbr.rel (%p236) target = $region36
        $region35: #{_policy_padded.1} parent=11 // pred_region
          _
        $region36: #{_policy_padded.1} parent=11 // pred_fallthru
          _
      $region12: #{_policy_padded.1} parent=5 // pred_fallthru
        _
      %p239 = scmp.lt.s32.totalorder %s17, 2
      // Predicated region
      $region37: #{_policy_padded.1} parent=5 // pred_check
        %p240 = pneg %p239
      $region38: #{_policy_padded.1} parent=5 // pred_check_branch
        %242 = sbr.rel (%p240) target = $region40
      $region39: #{_policy_padded.1} parent=5 // pred_region
        // Predicated region
        $region41: #{_policy_padded.1} parent=39 // pred_check
          %p243 = pneg %p37
        $region42: #{_policy_padded.1} parent=39 // pred_check_branch
          %245 = sbr.rel (%p243) target = $region44
        $region43: #{_policy_padded.1} parent=39 // pred_region
          %s246 = smul.u32 4, %s17
          %p247 = scmp.lt.s32.totalorder %s246, 7
          %s248 = scalar_select %p247, %s246, 7
          %s249 = smul.addr %s248, 8
          %s250 = scalar_lea.vmem %s0, %s249
          %s251 = smul.u32 4, %s17
        $region44: #{_policy_padded.1} parent=39 // pred_fallthru
          _
      $region40: #{_policy_padded.1} parent=5 // pred_fallthru
        _
      %p252 = scmp.le.s32.totalorder 1, %s17
      %p253 = scmp.lt.s32.totalorder %s17, 3
      %p254 = pnand %p252, %p253
      %p255 = pneg %p254
      // Predicated region
      $region45: #{_policy_padded.1} parent=5 // pred_check
        _
      $region46: #{_policy_padded.1} parent=5 // pred_check_branch
        %257 = sbr.rel (%p254) target = $region48
      $region47: #{_policy_padded.1} parent=5 // pred_region
        %s258 = ssub.s32 %s17, 1
        // Predicated region
        $region49: #{_policy_padded.1} parent=47 // pred_check
          %p259 = pneg %p148
        $region50: #{_policy_padded.1} parent=47 // pred_check_branch
          %261 = sbr.rel (%p259) target = $region52
        $region51: #{_policy_padded.1} parent=47 // pred_region
          %263 = dma.done [#allocation3], 1024
        $region52: #{_policy_padded.1} parent=47 // pred_fallthru
          _
        %s264 = smul.u32 4, %s22
        %p265 = scmp.lt.s32.totalorder %s264, 7
        %s266 = scalar_select %p265, %s264, 7
        %s267 = smul.addr %s266, 8
        %s268 = scalar_lea.vmem %s0, %s267
        %p269 = pneg %p43
        %p270 = pneg %p40
        %p271 = pneg %p64
        %p272 = pneg %p61
        %p273 = pneg %p85
        %p274 = pneg %p82
        %p275 = pneg %p106
        %p276 = pneg %p103
        %p277 = pneg %p127
        %p278 = pneg %p124
        %p279 = pneg %p148
        %p280 = pneg %p145
        %p281 = pneg %p169
        %p282 = pneg %p166
        %p283 = pneg %p195
        %p284 = pneg %p192
        %s285 = sand.u32 %s182, 1
        %s286 = scalar_lea.sflag [#allocation4], %s285
        %s287 = sand.u32 %s182, 1
        %s288 = smul.addr %s287, 16
        %s289 = scalar_lea.vmem [#allocation5], %s288
        %s290 = smul.u32 4, %s22
        %p291 = scmp.lt.s32.totalorder %s290, 7
        %s292 = scalar_select %p291, %s290, 7
        %s293 = smul.addr %s292, 8
        %s294 = scalar_lea.vmem %s0, %s293
        %s295 = smul.u32 4, %s22
        %s296 = smul.u32 4, %s22
        %v298 = vld [vmem:[%s294] sm:$0xff]
        %v299 = vld [vmem:[%s294 + $0x8] sm:$0xff]
        %v300 = vld [vmem:[%s294 + $0x10] sm:$0xff]
        %v301 = vld [vmem:[%s294 + $0x18] sm:$0xff]
        %v302 = vpack.c.bf16 %v299, %v298
        %v303 = vpack.c.bf16 %v301, %v300
        %v304 = vld [vmem:[%s1] sm:$0xf]
        %v305 = vld [vmem:[%s1 + $0x4] sm:$0xf]
        %v306 = vld [vmem:[%s2] sm:$0x1]
        %v308 = vperm.slane %v306, 0
        %v312 = vunpack.c.l.b16 %v304
        %v313 = vunpack.c.l.b16 %v305
        %v314 = vpack.c.b16 %v313, %v312
        %vm316 = vcmask 130048
        %v318 = vsel %vm316, %v302, 0
        %v321 = vsel %vm316, %v303, 0
        %323 = vmatpush.bf16.msra.mxu0 0
        %324 = vmatpush.bf16.msra.mxu0 0
        %325 = vmatpush.bf16.msra.mxu0 0
        %326 = vmatpush.bf16.msra.mxu0 0
        %327 = vmatpush.bf16.msra.mxu0 0
        %328 = vmatpush.bf16.msra.mxu0 0
        %329 = vmatpush.bf16.msra.mxu0 0
        %330 = vmatpush.bf16.msra.mxu0 %v314
        %331 = vmatmul.bf16.gmra.mxu0 %v318
        %v332 = vpop.f32.mrf.mxu0
        %v333 = vadd.f32 %v308, %v332
        %v334 = vpop.f32.mrf.mxu0
        %v335 = vadd.f32 %v308, %v334
        %336 = vmatmul.bf16.gmra.mxu0 %v321
        %v337 = vpop.f32.mrf.mxu0
        %v338 = vadd.f32 %v308, %v337
        %v339 = vpop.f32.mrf.mxu0
        %v340 = vadd.f32 %v308, %v339
        %341 = vdwg.mxu0
        %v342 = vmax.f32 %v333, 0.0
        %v343 = vmax.f32 %v335, 0.0
        %v344 = vmax.f32 %v338, 0.0
        %v345 = vmax.f32 %v340, 0.0
        %v346 = vpack.c.bf16 %v343, %v342
        %v347 = vpack.c.bf16 %v345, %v344
        %v348 = vld [vmem:[%s3] sm:$0xf]
        %v349 = vld [vmem:[%s3 + $0x4] sm:$0xf]
        %v350 = vld [vmem:[%s3 + $0x8] sm:$0xf]
        %v351 = vld [vmem:[%s3 + $0xc] sm:$0xf]
        %v352 = vld [vmem:[%s3 + $0x10] sm:$0xf]
        %v353 = vld [vmem:[%s3 + $0x14] sm:$0xf]
        %v354 = vld [vmem:[%s3 + $0x18] sm:$0xf]
        %v355 = vld [vmem:[%s3 + $0x1c] sm:$0xf]
        %v356 = vld [vmem:[%s3 + $0x20] sm:$0xf]
        %v357 = vld [vmem:[%s3 + $0x24] sm:$0xf]
        %v358 = vld [vmem:[%s3 + $0x28] sm:$0xf]
        %v359 = vld [vmem:[%s3 + $0x2c] sm:$0xf]
        %v360 = vld [vmem:[%s3 + $0x30] sm:$0xf]
        %v361 = vld [vmem:[%s3 + $0x34] sm:$0xf]
        %v362 = vld [vmem:[%s3 + $0x38] sm:$0xf]
        %v363 = vld [vmem:[%s3 + $0x3c] sm:$0xf]
        %v364 = vld [vmem:[%s4] sm:$0x1]
        %v366 = vperm.slane %v364, 0
        %v384 = vunpack.c.l.b16 %v348
        %v385 = vunpack.c.l.b16 %v349
        %v386 = vunpack.c.l.b16 %v350
        %v387 = vunpack.c.l.b16 %v351
        %v388 = vunpack.c.l.b16 %v352
        %v389 = vunpack.c.l.b16 %v353
        %v390 = vunpack.c.l.b16 %v354
        %v391 = vunpack.c.l.b16 %v355
        %v392 = vunpack.c.l.b16 %v356
        %v393 = vunpack.c.l.b16 %v357
        %v394 = vunpack.c.l.b16 %v358
        %v395 = vunpack.c.l.b16 %v359
        %v396 = vunpack.c.l.b16 %v360
        %v397 = vunpack.c.l.b16 %v361
        %v398 = vunpack.c.l.b16 %v362
        %v399 = vunpack.c.l.b16 %v363
        %v400 = vpack.c.b16 %v385, %v384
        %v401 = vpack.c.b16 %v387, %v386
        %v402 = vpack.c.b16 %v389, %v388
        %v403 = vpack.c.b16 %v391, %v390
        %v404 = vpack.c.b16 %v393, %v392
        %v405 = vpack.c.b16 %v395, %v394
        %v406 = vpack.c.b16 %v397, %v396
        %v407 = vpack.c.b16 %v399, %v398
        %416 = vmatpush.bf16.msra.mxu0 %v407
        %417 = vmatpush.bf16.msra.mxu0 %v406
        %418 = vmatpush.bf16.msra.mxu0 %v405
        %419 = vmatpush.bf16.msra.mxu0 %v404
        %420 = vmatpush.bf16.msra.mxu0 %v403
        %421 = vmatpush.bf16.msra.mxu0 %v402
        %422 = vmatpush.bf16.msra.mxu0 %v401
        %423 = vmatpush.bf16.msra.mxu0 %v400
        %424 = vmatmul.bf16.gmra.mxu0 %v346
        %v425 = vpop.f32.mrf.mxu0
        %v426 = vadd.f32 %v366, %v425
        %v427 = vpop.f32.mrf.mxu0
        %v428 = vadd.f32 %v366, %v427
        %429 = vmatmul.bf16.gmra.mxu0 %v347
        %v430 = vpop.f32.mrf.mxu0
        %v431 = vadd.f32 %v366, %v430
        %v432 = vpop.f32.mrf.mxu0
        %v433 = vadd.f32 %v366, %v432
        %434 = vdwg.mxu0
        %v435 = vmax.f32 %v426, 0.0
        %v436 = vmax.f32 %v428, 0.0
        %v437 = vmax.f32 %v431, 0.0
        %v438 = vmax.f32 %v433, 0.0
        %v439 = vpack.c.bf16 %v436, %v435
        %v440 = vpack.c.bf16 %v438, %v437
        %v441 = vld [vmem:[#allocation2] sm:$0xf]
        %v442 = vld [vmem:[#allocation2 + $0x4] sm:$0xf]
        %v443 = vld [vmem:[#allocation2 + $0x8] sm:$0xf]
        %v444 = vld [vmem:[#allocation2 + $0xc] sm:$0xf]
        %v445 = vld [vmem:[#allocation2 + $0x10] sm:$0xf]
        %v446 = vld [vmem:[#allocation2 + $0x14] sm:$0xf]
        %v447 = vld [vmem:[#allocation2 + $0x18] sm:$0xf]
        %v448 = vld [vmem:[#allocation2 + $0x1c] sm:$0xf]
        %v449 = vld [vmem:[#allocation2 + $0x20] sm:$0xf]
        %v450 = vld [vmem:[#allocation2 + $0x24] sm:$0xf]
        %v451 = vld [vmem:[#allocation2 + $0x28] sm:$0xf]
        %v452 = vld [vmem:[#allocation2 + $0x2c] sm:$0xf]
        %v453 = vld [vmem:[#allocation2 + $0x30] sm:$0xf]
        %v454 = vld [vmem:[#allocation2 + $0x34] sm:$0xf]
        %v455 = vld [vmem:[#allocation2 + $0x38] sm:$0xf]
        %v456 = vld [vmem:[#allocation2 + $0x3c] sm:$0xf]
        %v457 = vld [vmem:[%s6] sm:$0x1]
        %v459 = vperm.slane %v457, 0
        %v477 = vunpack.c.l.b16 %v441
        %v478 = vunpack.c.l.b16 %v442
        %v479 = vunpack.c.l.b16 %v443
        %v480 = vunpack.c.l.b16 %v444
        %v481 = vunpack.c.l.b16 %v445
        %v482 = vunpack.c.l.b16 %v446
        %v483 = vunpack.c.l.b16 %v447
        %v484 = vunpack.c.l.b16 %v448
        %v485 = vunpack.c.l.b16 %v449
        %v486 = vunpack.c.l.b16 %v450
        %v487 = vunpack.c.l.b16 %v451
        %v488 = vunpack.c.l.b16 %v452
        %v489 = vunpack.c.l.b16 %v453
        %v490 = vunpack.c.l.b16 %v454
        %v491 = vunpack.c.l.b16 %v455
        %v492 = vunpack.c.l.b16 %v456
        %v493 = vpack.c.b16 %v478, %v477
        %v494 = vpack.c.b16 %v480, %v479
        %v495 = vpack.c.b16 %v482, %v481
        %v496 = vpack.c.b16 %v484, %v483
        %v497 = vpack.c.b16 %v486, %v485
        %v498 = vpack.c.b16 %v488, %v487
        %v499 = vpack.c.b16 %v490, %v489
        %v500 = vpack.c.b16 %v492, %v491
        %509 = vmatpush.bf16.msra.mxu0 %v500
        %510 = vmatpush.bf16.msra.mxu0 %v499
        %511 = vmatpush.bf16.msra.mxu0 %v498
        %512 = vmatpush.bf16.msra.mxu0 %v497
        %513 = vmatpush.bf16.msra.mxu0 %v496
        %514 = vmatpush.bf16.msra.mxu0 %v495
        %515 = vmatpush.bf16.msra.mxu0 %v494
        %516 = vmatpush.bf16.msra.mxu0 %v493
        %517 = vmatmul.bf16.gmra.mxu0 %v439
        %v518 = vpop.f32.mrf.mxu0
        %v519 = vadd.f32 %v459, %v518
        %v520 = vpop.f32.mrf.mxu0
        %v521 = vadd.f32 %v459, %v520
        %522 = vmatmul.bf16.gmra.mxu0 %v440
        %v523 = vpop.f32.mrf.mxu0
        %v524 = vadd.f32 %v459, %v523
        %v525 = vpop.f32.mrf.mxu0
        %v526 = vadd.f32 %v459, %v525
        %527 = vdwg.mxu0
        %528 = vmax.xlane.f32.xlu0 %v519
        %v529 = vpop.xlane.xlu0 %528
        %530 = vmax.xlane.f32.xlu0 %v521
        %v531 = vpop.xlane.xlu0 %530
        %532 = vmax.xlane.f32.xlu0 %v524
        %v533 = vpop.xlane.xlu0 %532
        %534 = vmax.xlane.f32.xlu0 %v526
        %v535 = vpop.xlane.xlu0 %534
        %v536 = vsub.f32 %v519, %v529
        %v537 = vsub.f32 %v521, %v531
        %v538 = vsub.f32 %v524, %v533
        %v539 = vsub.f32 %v526, %v535
        %v540 = vmul.f32 %v536, 1.442695
        %v541 = vpow.pop %v540
        %v542 = vmul.f32 %v537, 1.442695
        %v543 = vpow.pop %v542
        %v544 = vmul.f32 %v538, 1.442695
        %v545 = vpow.pop %v544
        %v546 = vmul.f32 %v539, 1.442695
        %v547 = vpow.pop %v546
        %548 = vadd.xlane.f32.xlu0 %v541
        %v549 = vpop.xlane.xlu0 %548
        %550 = vadd.xlane.f32.xlu0 %v543
        %v551 = vpop.xlane.xlu0 %550
        %552 = vadd.xlane.f32.xlu0 %v545
        %v553 = vpop.xlane.xlu0 %552
        %554 = vadd.xlane.f32.xlu0 %v547
        %v555 = vpop.xlane.xlu0 %554
        %v556 = vrcp.pop %v549
        %v557 = vmul.f32 %v549, %v556
        %v558 = vsub.f32 1.0, %v557
        %v559 = vmul.f32 %v556, %v558
        %v560 = vadd.f32 %v556, %v559
        %vm561 = vweird.f32 %v549
        %vm562 = vweird.f32 %v556
        %vm563 = vmor %vm561, %vm562
        %v564 = vsel %vm563, %v556, %v560
        %v565 = vand.u32 2147483647, %v549
        %vm566 = vcmp.eq.f32.partialorder %v565, 8.507059e+37
        %v567 = vand.u32 %v549, 2147483648
        %v568 = vor.u32 1.1754944e-38, %v567
        %v569 = vsel %vm566, %v568, %v564
        %v570 = vmul.f32 %v541, %v569
        %v571 = vrcp.pop %v551
        %v572 = vmul.f32 %v551, %v571
        %v573 = vsub.f32 1.0, %v572
        %v574 = vmul.f32 %v571, %v573
        %v575 = vadd.f32 %v571, %v574
        %vm576 = vweird.f32 %v551
        %vm577 = vweird.f32 %v571
        %vm578 = vmor %vm576, %vm577
        %v579 = vsel %vm578, %v571, %v575
        %v580 = vand.u32 2147483647, %v551
        %vm581 = vcmp.eq.f32.partialorder %v580, 8.507059e+37
        %v582 = vand.u32 %v551, 2147483648
        %v583 = vor.u32 1.1754944e-38, %v582
        %v584 = vsel %vm581, %v583, %v579
        %v585 = vmul.f32 %v543, %v584
        %v586 = vrcp.pop %v553
        %v587 = vmul.f32 %v553, %v586
        %v588 = vsub.f32 1.0, %v587
        %v589 = vmul.f32 %v586, %v588
        %v590 = vadd.f32 %v586, %v589
        %vm591 = vweird.f32 %v553
        %vm592 = vweird.f32 %v586
        %vm593 = vmor %vm591, %vm592
        %v594 = vsel %vm593, %v586, %v590
        %v595 = vand.u32 2147483647, %v553
        %vm596 = vcmp.eq.f32.partialorder %v595, 8.507059e+37
        %v597 = vand.u32 %v553, 2147483648
        %v598 = vor.u32 1.1754944e-38, %v597
        %v599 = vsel %vm596, %v598, %v594
        %v600 = vmul.f32 %v545, %v599
        %v601 = vrcp.pop %v555
        %v602 = vmul.f32 %v555, %v601
        %v603 = vsub.f32 1.0, %v602
        %v604 = vmul.f32 %v601, %v603
        %v605 = vadd.f32 %v601, %v604
        %vm606 = vweird.f32 %v555
        %vm607 = vweird.f32 %v601
        %vm608 = vmor %vm606, %vm607
        %v609 = vsel %vm608, %v601, %v605
        %v610 = vand.u32 2147483647, %v555
        %vm611 = vcmp.eq.f32.partialorder %v610, 8.507059e+37
        %v612 = vand.u32 %v555, 2147483648
        %v613 = vor.u32 1.1754944e-38, %v612
        %v614 = vsel %vm611, %v613, %v609
        %v615 = vmul.f32 %v547, %v614
        %v616 = vpack.c.bf16 %v570, %v570
        %v617 = vpack.c.bf16 %v585, %v585
        %v618 = vpack.c.bf16 %v600, %v600
        %v619 = vpack.c.bf16 %v615, %v615
        %620 = vst [vmem:[%s289] sm:$0xf] %v616
        %621 = vst [vmem:[%s289 + $0x4] sm:$0xf] %v617
        %622 = vst [vmem:[%s289 + $0x8] sm:$0xf] %v618
        %623 = vst [vmem:[%s289 + $0xc] sm:$0xf] %v619
        %s624 = sand.u32 %s182, 1
        %s625 = scalar_lea.sflag [#allocation4], %s624
        %s626 = sand.u32 %s182, 1
        %s627 = smul.addr %s626, 16
        %s628 = scalar_lea.vmem [#allocation5], %s627
        // Predicated region
        $region53: #{_policy_padded.1} parent=47 // pred_check
          %p629 = pneg %p192
        $region54: #{_policy_padded.1} parent=47 // pred_check_branch
          %631 = sbr.rel (%p629) target = $region56
        $region55: #{_policy_padded.1} parent=47 // pred_region
          %s632 = smul.u32 4, %s22
          %634 = vsyncadd %s625, 0
          %s635 = smul.addr %s632, 4
          %s636 = scalar_lea.hbm %s7, %s635
          %s637 = sshll.u32 %s628, 4
          %s638 = int_to_ptr.vmem [resolvable:$true] %s637
          %s639 = sshll.u32 %s636, 4
          %s640 = int_to_ptr.hbm [resolvable:$true] %s639
          %645 = dma.vmem_to_hbm [thread:$0]  %s638, 256, %s640, %s625, 64, 64, 4
        $region56: #{_policy_padded.1} parent=47 // pred_fallthru
          _
      $region48: #{_policy_padded.1} parent=5 // pred_fallthru
        _
      %p646 = scmp.le.s32.totalorder 2, %s17
      // Predicated region
      $region57: #{_policy_padded.1} parent=5 // pred_check
        %p647 = pneg %p646
      $region58: #{_policy_padded.1} parent=5 // pred_check_branch
        %649 = sbr.rel (%p647) target = $region60
      $region59: #{_policy_padded.1} parent=5 // pred_region
        %s650 = ssub.s32 %s17, 2
        // Predicated region
        $region61: #{_policy_padded.1} parent=59 // pred_check
          %p651 = pneg %p198
        $region62: #{_policy_padded.1} parent=59 // pred_check_branch
          %653 = sbr.rel (%p651) target = $region64
        $region63: #{_policy_padded.1} parent=59 // pred_region
          %s654 = sand.u32 %s183, 1
          %s655 = scalar_lea.sflag [#allocation4], %s654
          %s656 = sand.u32 %s183, 1
          %s657 = smul.addr %s656, 16
          %s658 = scalar_lea.vmem [#allocation5], %s657
          %660 = dma.done %s655, 256
        $region64: #{_policy_padded.1} parent=59 // pred_fallthru
          _
      $region60: #{_policy_padded.1} parent=5 // pred_fallthru
        _
    $region6: #{_policy_padded.1} parent=1 // loop_footer
      %s21 = sadd.s32 1, %s17
    $region7: #{_policy_padded.1} parent=1 // loop_footer_branch
      %16 = sbr.rel target = $region3
    $region8: #{_policy_padded.1} parent=1 // loop_exit
      _
    %661 = vsyncpa [#allocation3], 1
    %s662 = scalar_lea.sflag [#allocation3], 1
    %663 = vsyncpa %s662, 1
    %664 = vsyncpa [#allocation4], 1
    %s665 = scalar_lea.sflag [#allocation4], 1
    %666 = vsyncpa %s665, 1

</llo_original>
